<compile_context>
chip_gen: v5e
topology: v5e:2x2
jax: 0.10.0
libtpu: 0.0.40
codegen_flags: <defaults>
</compile_context>

<pallas_src>
import math
from functools import partial

import jax
import jax.numpy as jnp
from jax.experimental import pallas as pl
from jax.experimental.pallas import tpu as pltpu

_NEG_BIG = -1e30  # large finite negative instead of -inf (avoids inf-inf NaN)


def mil_attention_kernel(tile_valid_ref, x_ref, mask_ref, wvu_ref, bvu_ref,
                         ww_ref, bw_ref, wh_ref, bh_ref, out_ref,
                         m_sc, l_sc, acc_sc):
    """One (TB, TN) tile of the gated-attention MIL forward pass.

    tile_valid_ref : (nb*nn,) i32 SMEM  1 if this (b,n) tile has any valid instance
    x_ref    : (TB, TN, D)   instance embeddings (f32 or bf16)
    mask_ref : (TB, TN)      1.0 = valid instance, 0.0 = masked (f32, lane-dense)
    wvu_ref  : (D, 2*Hp)     fused [attention_V | attention_U] weights (lane-padded)
    bvu_ref  : (1, 2*Hp)     fused biases (f32)
    ww_ref   : (1, Hp)       attention_w weight as a row (VPU multiply + lane reduce)
    bw_ref   : (1,)          attention_w bias (SMEM scalar)
    wh_ref   : (D, Cp)       concatenated head weights, lane-padded to Cp
    bh_ref   : (1, Cp)       concatenated head biases, lane-padded (f32)
    out_ref  : (TB, Cp)      concatenated logits (f32), written at last N step
    m_sc/l_sc: (TB, 1)  f32  online-softmax running max / denominator
    acc_sc   : (TB, D)  f32  attention-weighted sum accumulator
    """
    b_idx = pl.program_id(0)
    n_idx = pl.program_id(1)
    num_n = pl.num_programs(1)

    @pl.when(n_idx == 0)
    def _init():
        m_sc[...] = jnp.full(m_sc.shape, _NEG_BIG, dtype=jnp.float32)
        l_sc[...] = jnp.zeros(l_sc.shape, dtype=jnp.float32)
        acc_sc[...] = jnp.zeros(acc_sc.shape, dtype=jnp.float32)

    # Skip all MXU / EUP / softmax work on tiles with no valid instance
    # (padded N region or fully-masked block); the carry needs no update.
    @pl.when(tile_valid_ref[b_idx * num_n + n_idx] > 0)
    def _compute():
        TB, TN, D = x_ref.shape
        Hp = ww_ref.shape[1]

        x = x_ref[...]                                    # (TB, TN, D)
        mask = mask_ref[...].reshape(TB, TN, 1)           # lane-dense -> sublane-major once

        # Fused V/U projection: single MXU pass over the x tile.
        x2 = x.reshape(TB * TN, D)                        # sublane-merge only (TN % 8 == 0)
        g = jnp.dot(x2, wvu_ref[...],
                    preferred_element_type=jnp.float32) + bvu_ref[...]     # (TB*TN, 2Hp)
        # Gated attention. sigmoid via tanh identity: one EUP op/elem instead of exp+recip.
        gate = jnp.tanh(g[:, :Hp]) * (0.5 * (jnp.tanh(0.5 * g[:, Hp:]) + 1.0))

        # Attention scores via VPU multiply + lane reduction (no 1-wide MXU pass).
        s = (jnp.sum(gate * ww_ref[...], axis=-1, keepdims=True)
             + bw_ref[0]).reshape(TB, TN, 1)
        s = jnp.where(mask > 0.0, s, _NEG_BIG)

        # Online masked-softmax accumulation across the N grid axis.
        m_prev = m_sc[...]                                # (TB, 1)
        m_new = jnp.maximum(m_prev, jnp.max(s, axis=1))   # (TB, 1)
        alpha = jnp.exp(m_prev - m_new)                   # (TB, 1), <= 1, always finite
        p = jnp.exp(s - m_new[:, :, None]) * mask         # (TB, TN, 1), 0 at masked slots

        l_sc[...] = alpha * l_sc[...] + jnp.sum(p, axis=1)                  # (TB, 1)
        if x_ref.dtype == jnp.float32:
            px = p * x                                                      # f32 VPU path
        else:
            # bf16 multiply (packs 2/sublane slot on v6e/v7x), f32 accumulate.
            px = (p.astype(x_ref.dtype) * x).astype(jnp.float32)
        acc_sc[...] = alpha * acc_sc[...] + jnp.sum(px, axis=1)             # (TB, D)
        m_sc[...] = m_new

    @pl.when(n_idx == num_n - 1)
    def _finalize():
        l = l_sc[...]                                     # (TB, 1)
        row_valid = l > 0.0                               # row has >= 1 valid instance
        l_safe = jnp.where(row_valid, l, 1.0)
        inv_l = pl.reciprocal(l_safe, approx=True)
        inv_l = inv_l * (2.0 - l_safe * inv_l)            # one Newton step -> ~f32 accuracy
        pooled = jnp.where(row_valid, acc_sc[...] * inv_l, 0.0)             # (TB, D)
        logits = jnp.dot(pooled.astype(wh_ref.dtype), wh_ref[...],
                         preferred_element_type=jnp.float32) + bh_ref[...]  # (TB, Cp)
        out_ref[...] = logits.astype(out_ref.dtype)


def _xavier_uniform(key, fan_in, fan_out):
    a = math.sqrt(6.0 / (fan_in + fan_out))
    return jax.random.uniform(key, (fan_in, fan_out), jnp.float32, -a, a)


def _round_up(v, m):
    return (v + m - 1) // m * m


class MILLinearProbingPallas:
    """JAX/Pallas counterpart of MultiInstanceLinearProbing (pooling_mode='attention')."""

    def __init__(self, embedding_dim, head_structure, attention_hidden=128, seed=0):
        self.embedding_dim = embedding_dim
        self.head_structure = dict(head_structure)
        self.attention_hidden = attention_hidden

        key = jax.random.PRNGKey(seed)
        kv, ku, kw, *khs = jax.random.split(key, 3 + len(head_structure))

        D, H = embedding_dim, attention_hidden
        # Xavier-uniform weights, zero biases (matches _reset_parameters).
        self.Wv = _xavier_uniform(kv, D, H)
        self.bv = jnp.zeros((1, H), jnp.float32)
        self.Wu = _xavier_uniform(ku, D, H)
        self.bu = jnp.zeros((1, H), jnp.float32)
        self.Ww = _xavier_uniform(kw, H, 1)
        self.bw = jnp.zeros((1, 1), jnp.float32)

        # Kernel-side fused layouts; V and U blocks each lane-padded to a multiple of 128
        # so the in-kernel g[:, :Hp] / g[:, Hp:] split never crosses a vreg tile boundary.
        self.Hp = max(128, _round_up(H, 128))
        padH = self.Hp - H
        Wv_p = jnp.pad(self.Wv, ((0, 0), (0, padH)))
        Wu_p = jnp.pad(self.Wu, ((0, 0), (0, padH)))
        self.Wvu = jnp.concatenate([Wv_p, Wu_p], axis=1)             # (D, 2*Hp)
        bv_p = jnp.pad(self.bv, ((0, 0), (0, padH)))
        bu_p = jnp.pad(self.bu, ((0, 0), (0, padH)))
        self.bvu = jnp.concatenate([bv_p, bu_p], axis=1)             # (1, 2*Hp)
        self.ww_row = jnp.pad(self.Ww.reshape(1, H), ((0, 0), (0, padH)))  # (1, Hp)
        self.bw_s = self.bw.reshape(1)                                # (1,) SMEM scalar

        self.head_names = list(self.head_structure.keys())
        self.head_sizes = [self.head_structure[n] for n in self.head_names]
        Whs = [_xavier_uniform(k, D, c) for k, c in zip(khs, self.head_sizes)]
        self.Wh = jnp.concatenate(Whs, axis=1)                        # (D, C_total)
        self.C_total = sum(self.head_sizes)
        self.bh = jnp.zeros((1, self.C_total), jnp.float32)
        # Lane-dense (padded to a multiple of 128) copies for the kernel store path.
        self.Cp = max(128, _round_up(self.C_total, 128))
        self.Wh_pad = jnp.pad(self.Wh, ((0, 0), (0, self.Cp - self.C_total)))
        self.bh_pad = jnp.pad(self.bh, ((0, 0), (0, self.Cp - self.C_total)))

    @partial(jax.jit, static_argnums=0)
    def _run_kernel(self, x, mask_f):
        B, N, D = x.shape
        Hp, Cp = self.Hp, self.Cp
        itemsize = x.dtype.itemsize

        # Per-generation VMEM capacity (v5e/v6e: 128 MiB, v7x: 64 MiB); conservative fallback.
        try:
            vmem_cap = int(getattr(pltpu.get_tpu_info(), "vmem_capacity_bytes", 64 << 20))
        except Exception:
            vmem_cap = 64 << 20

        # Attention / head weights follow x's compute dtype (bf16 halves HBM + residency);
        # accumulation / softmax / logits stay in f32.
        wvu = self.Wvu.astype(x.dtype)
        wh = self.Wh_pad.astype(x.dtype)
        weights_b = 2 * (wvu.size * wvu.dtype.itemsize + wh.size * wh.dtype.itemsize
                         + (self.bvu.size + self.ww_row.size + self.bh_pad.size) * 4)

        # Instance (N) tile: 128 lanes-worth of sublanes by default, 256 when the chip has
        # VMEM headroom (v5e/v6e) and N is large enough to benefit.
        B8 = _round_up(B, 8)
        if N >= 128:
            TN = 256 if (N >= 256 and vmem_cap > (96 << 20)) else 128
        else:
            TN = _round_up(N, 8)

        # Batch tile: as large as VMEM allows (amortizes the ~0.35us grid-step overhead and
        # fills the MXU in the head matmul); keep >=2 B-tiles when B is large so the
        # "parallel" axis can still shard across v7x's two TensorCores.
        TB = min(128, B8)
        if B8 >= 64 and B8 // TB < 2:
            TB = min(128, _round_up((B8 + 1) // 2, 8))

        def tile_bytes(tb, tn):
            return (2 * (tb * tn * D * itemsize + tb * tn * 4)   # x + mask, double-buffered
                    + 2 * tb * Cp * 4                            # output block
                    + (tb * (D + 2 * 128)) * 4)                  # scratch (m/l lane-padded)

        budget = int(0.5 * vmem_cap) - weights_b
        while TB > 8 and tile_bytes(TB, TN) > budget:
            TB = max(8, _round_up(TB // 2, 8))
        while TN > 128 and tile_bytes(TB, TN) > budget:
            TN = 128

        B_pad = _round_up(B, TB)
        N_pad = _round_up(N, TN)
        nb, nn = B_pad // TB, N_pad // TN

        x_p = jnp.pad(x, ((0, B_pad - B), (0, N_pad - N), (0, 0)))
        m_p = jnp.pad(mask_f, ((0, B_pad - B), (0, N_pad - N)))      # (B_pad, N_pad), lane-dense

        # Per-(b,n)-tile validity bits, scalar-prefetched to SMEM -> skip dead tiles.
        tile_valid = (jnp.max(m_p.reshape(nb, TB, nn, TN), axis=(1, 3)) > 0.0)
        tile_valid = tile_valid.astype(jnp.int32).reshape(-1)        # (nb*nn,)

        vmem_need = tile_bytes(TB, TN) + weights_b
        vmem_limit = int(max(32 << 20, min(int(0.85 * vmem_cap), 2 * vmem_need)))

        flops = (2 * B_pad * N_pad * D * 2 * Hp      # fused V/U projection
                 + 6 * B_pad * N_pad * Hp            # gate + score reduce
                 + 3 * B_pad * N_pad * D             # attention-weighted pooling
                 + 2 * B_pad * D * Cp)               # heads
        transcendentals = B_pad * N_pad * (2 * Hp + 2)
        bytes_accessed = (x_p.size * itemsize + m_p.size * 4
                          + weights_b // 2 + B_pad * Cp * 4)

        grid_spec = pltpu.PrefetchScalarGridSpec(
            num_scalar_prefetch=1,
            grid=(nb, nn),
            in_specs=[
                pl.BlockSpec((TB, TN, D), lambda b, n, tv: (b, n, 0)),     # x (streamed)
                pl.BlockSpec((TB, TN), lambda b, n, tv: (b, n)),           # mask (lane-dense)
                pl.BlockSpec((D, 2 * Hp), lambda b, n, tv: (0, 0)),        # Wvu (resident)
                pl.BlockSpec((1, 2 * Hp), lambda b, n, tv: (0, 0)),        # bvu
                pl.BlockSpec((1, Hp), lambda b, n, tv: (0, 0)),            # ww row
                pl.BlockSpec(memory_space=pltpu.MemorySpace.SMEM),         # bw scalar
                pl.BlockSpec((D, Cp), lambda b, n, tv: (0, 0)),            # Wh (padded)
                pl.BlockSpec((1, Cp), lambda b, n, tv: (0, 0)),            # bh (padded)
            ],
            out_specs=pl.BlockSpec((TB, Cp), lambda b, n, tv: (b, 0)),
            scratch_shapes=[
                pltpu.VMEM((TB, 1), jnp.float32),   # running max
                pltpu.VMEM((TB, 1), jnp.float32),   # running denominator
                pltpu.VMEM((TB, D), jnp.float32),   # pooled accumulator
            ])

        out = pl.pallas_call(
            mil_attention_kernel,
            out_shape=jax.ShapeDtypeStruct((B_pad, Cp), jnp.float32),
            grid_spec=grid_spec,
            compiler_params=pltpu.CompilerParams(
                dimension_semantics=("parallel", "arbitrary"),
                vmem_limit_bytes=vmem_limit),
            cost_estimate=pl.CostEstimate(
                flops=int(flops), transcendentals=int(transcendentals),
                bytes_accessed=int(bytes_accessed)),
        )(tile_valid, x_p, m_p, wvu, self.bvu, self.ww_row, self.bw_s,
          wh, self.bh_pad)

        return out[:B, :self.C_total]

    def __call__(self, x, mask=None):
        """x: [B, N, D] (f32 or bf16); mask: optional [B, N] bool. Returns dict of logits."""
        if x.ndim != 3:
            # TODO(synk): 4-D hierarchical attention / cls_token pooling not implemented.
            raise ValueError("This Pallas implementation supports 3-D input [B, N, D].")
        B, N, D = x.shape
        assert D == self.embedding_dim
        if mask is None:
            mask_f = jnp.ones((B, N), jnp.float32)
        else:
            mask_f = mask.astype(jnp.float32)
        logits = self._run_kernel(x, mask_f)
        out, off = {}, 0
        for name, c in zip(self.head_names, self.head_sizes):
            out[name] = logits[:, off:off + c]
            off += c
        return out

    # Pure-JAX reference (mirrors the PyTorch forward, f32) for verification.
    def reference(self, x, mask=None):
        x = x.astype(jnp.float32)
        B, N, D = x.shape
        if mask is None:
            mask = jnp.ones((B, N), bool)
        mask = mask.astype(bool)
        a_v = jnp.tanh(x @ self.Wv + self.bv)
        a_u = jax.nn.sigmoid(x @ self.Wu + self.bu)
        A = (a_v * a_u) @ self.Ww + self.bw                    # (B, N, 1)
        A = jnp.where(mask[..., None], A, -jnp.inf)
        A = jax.nn.softmax(A, axis=1)
        pooled = jnp.sum(A * x, axis=1)                        # (B, D)
        row_valid = jnp.any(mask, axis=1, keepdims=True)
        pooled = jnp.where(row_valid, pooled, 0.0)
        logits = pooled @ self.Wh + self.bh
        out, off = {}, 0
        for name, c in zip(self.head_names, self.head_sizes):
            out[name] = logits[:, off:off + c]
            off += c
        return out


if __name__ == "__main__":
    B, N, D, H = 2, 8, 32, 16
    head_structure = {"task_a": 4, "task_b": 2}

    model = MILLinearProbingPallas(embedding_dim=D, head_structure=head_structure,
                                   attention_hidden=H, seed=0)

    key = jax.random.PRNGKey(0)
    kx, km = jax.random.split(key)
    x = jax.random.normal(kx, (B, N, D), jnp.float32)
    # Deterministic mask with a few masked-out instances (each sample keeps >=1 valid).
    mask = jnp.array(
        [[True] * N,
         [True, True, False, True, False, True, True, False]], dtype=bool)

    # f32 path vs f32 reference.
    out = model(x, mask)
    jax.block_until_ready(out)
    ref = model.reference(x, mask)
    for name in head_structure:
        assert out[name].shape == (B, head_structure[name])
        assert jnp.allclose(out[name], ref[name], atol=1e-3, rtol=1e-3), name

    # mask=None path.
    out2 = model(x, None)
    ref2 = model.reference(x, None)
    for name in head_structure:
        assert jnp.allclose(out2[name], ref2[name], atol=1e-3, rtol=1e-3), name

    # bf16 input path (halved HBM traffic; f32 accumulation inside the kernel).
    out_bf = model(x.astype(jnp.bfloat16), mask)
    for name in head_structure:
        assert jnp.allclose(out_bf[name], ref[name], atol=5e-2, rtol=5e-2), name

    # Per-sample fully-masked bag: no NaNs, falls back to bias-only (zero) logits.
    mask_allmasked_row = jnp.array([[True] * N, [False] * N], dtype=bool)
    out3 = model(x, mask_allmasked_row)
    ref3 = model.reference(x, mask_allmasked_row)
    for name in head_structure:
        assert jnp.all(jnp.isfinite(out3[name])), name
        assert jnp.allclose(out3[name][1], 0.0, atol=1e-6), name
        assert jnp.allclose(out3[name], ref3[name], atol=1e-3, rtol=1e-3), name

    # Multi-N-tile path: online softmax across N tiles + padded/masked tile handling.
    B2, N2 = 3, 200
    x2 = jax.random.normal(jax.random.PRNGKey(1), (B2, N2, D), jnp.float32)
    mask2 = jax.random.uniform(jax.random.PRNGKey(2), (B2, N2)) > 0.3
    mask2 = mask2.at[:, 0].set(True)   # guarantee >=1 valid instance per sample
    out4 = model(x2, mask2)
    ref4 = model.reference(x2, mask2)
    for name in head_structure:
        assert jnp.allclose(out4[name], ref4[name], atol=1e-3, rtol=1e-3), name

    print("KERNEL_OK")
</pallas_src>

<mosaic_0001>
module attributes {stable_mosaic.version = 11 : i64} {
  func.func @mil_attention_kernel(%arg0: i32, %arg1: i32, %arg2: memref<1xi32, #tpu.memory_space<smem>>, %arg3: memref<8x8x32xf32, #tpu.memory_space<vmem>>, %arg4: memref<8x8xf32, #tpu.memory_space<vmem>>, %arg5: memref<32x256xf32, #tpu.memory_space<vmem>>, %arg6: memref<1x256xf32, #tpu.memory_space<vmem>>, %arg7: memref<1x128xf32, #tpu.memory_space<vmem>>, %arg8: memref<1xf32, #tpu.memory_space<smem>>, %arg9: memref<32x128xf32, #tpu.memory_space<vmem>>, %arg10: memref<1x128xf32, #tpu.memory_space<vmem>>, %arg11: memref<8x128xf32, #tpu.memory_space<vmem>>, %arg12: memref<8x1xf32, #tpu.memory_space<vmem>>, %arg13: memref<8x1xf32, #tpu.memory_space<vmem>>, %arg14: memref<8x32xf32, #tpu.memory_space<vmem>>) attributes {dimension_semantics = [#tpu.dimension_semantics<parallel>, #tpu.dimension_semantics<arbitrary>], iteration_bounds = array<i64: 1, 1>, scalar_prefetch = 1 : i64, scratch_operands = 3 : i64, tpu.core_type = #tpu.core_type<tc>, window_params = [{transform_indices = @transform_0, window_bounds = array<i64: 8, 8, 32>}, {transform_indices = @transform_1, window_bounds = array<i64: 8, 8>}, {pipeline_mode = #tpu.pipeline_mode<synchronous>, transform_indices = @transform_2, window_bounds = array<i64: 32, 256>}, {pipeline_mode = #tpu.pipeline_mode<synchronous>, transform_indices = @transform_3, window_bounds = array<i64: 1, 256>}, {pipeline_mode = #tpu.pipeline_mode<synchronous>, transform_indices = @transform_4, window_bounds = array<i64: 1, 128>}, {transform_indices = @transform_5, window_bounds = array<i64: 1>}, {pipeline_mode = #tpu.pipeline_mode<synchronous>, transform_indices = @transform_6, window_bounds = array<i64: 32, 128>}, {pipeline_mode = #tpu.pipeline_mode<synchronous>, transform_indices = @transform_7, window_bounds = array<i64: 1, 128>}, {transform_indices = @transform_8, window_bounds = array<i64: 8, 128>}]} {
    %c0_i32 = arith.constant 0 : i32
    %0 = arith.cmpi eq, %arg1, %c0_i32 : i32
    %1 = arith.extui %0 : i1 to i32
    %c0_i32_0 = arith.constant 0 : i32
    %2 = arith.cmpi ne, %1, %c0_i32_0 : i32
    scf.if %2 {
      %cst = arith.constant -1.000000e+30 : f32
      %13 = vector.broadcast %cst : f32 to vector<8x1xf32>
      %c0 = arith.constant 0 : index
      %c0_5 = arith.constant 0 : index
      %14 = vector.load %arg12[%c0, %c0_5] : memref<8x1xf32, #tpu.memory_space<vmem>>, vector<8x1xf32>
      tpu.vector_store %arg12[%c0, %c0_5], %13 {strides = array<i32>} : memref<8x1xf32, #tpu.memory_space<vmem>>, vector<8x1xf32>,
      %cst_6 = arith.constant 0.000000e+00 : f32
      %15 = vector.broadcast %cst_6 : f32 to vector<8x1xf32>
      %c0_7 = arith.constant 0 : index
      %c0_8 = arith.constant 0 : index
      %16 = vector.load %arg13[%c0_7, %c0_8] : memref<8x1xf32, #tpu.memory_space<vmem>>, vector<8x1xf32>
      tpu.vector_store %arg13[%c0_7, %c0_8], %15 {strides = array<i32>} : memref<8x1xf32, #tpu.memory_space<vmem>>, vector<8x1xf32>,
      %cst_9 = arith.constant 0.000000e+00 : f32
      %17 = vector.broadcast %cst_9 : f32 to vector<8x32xf32>
      %c0_10 = arith.constant 0 : index
      %c0_11 = arith.constant 0 : index
      %18 = vector.load %arg14[%c0_10, %c0_11] : memref<8x32xf32, #tpu.memory_space<vmem>>, vector<8x32xf32>
      tpu.vector_store %arg14[%c0_10, %c0_11], %17 {strides = array<i32>} : memref<8x32xf32, #tpu.memory_space<vmem>>, vector<8x32xf32>,
    } else {
    }
    %c1_i32 = arith.constant 1 : i32
    %3 = arith.muli %arg0, %c1_i32 : i32
    %4 = arith.addi %3, %arg1 : i32
    %5 = arith.index_cast %4 : i32 to index
    %6 = memref.load %arg2[%5] : memref<1xi32, #tpu.memory_space<smem>>
    %c0_i32_1 = arith.constant 0 : i32
    %7 = arith.cmpi sgt, %6, %c0_i32_1 : i32
    %8 = arith.extui %7 : i1 to i32
    %c0_i32_2 = arith.constant 0 : i32
    %9 = arith.cmpi ne, %8, %c0_i32_2 : i32
    scf.if %9 {
      %c0 = arith.constant 0 : index
      %c0_5 = arith.constant 0 : index
      %c0_6 = arith.constant 0 : index
      %13 = vector.load %arg3[%c0, %c0_5, %c0_6] : memref<8x8x32xf32, #tpu.memory_space<vmem>>, vector<8x8x32xf32>
      %c0_7 = arith.constant 0 : index
      %c0_8 = arith.constant 0 : index
      %14 = vector.load %arg4[%c0_7, %c0_8] : memref<8x8xf32, #tpu.memory_space<vmem>>, vector<8x8xf32>
      %15 = vector.shape_cast %14 : vector<8x8xf32> to vector<8x8x1xf32>
      %16 = vector.shape_cast %13 : vector<8x8x32xf32> to vector<64x32xf32>
      %c0_9 = arith.constant 0 : index
      %c0_10 = arith.constant 0 : index
      %17 = vector.load %arg5[%c0_9, %c0_10] : memref<32x256xf32, #tpu.memory_space<vmem>>, vector<32x256xf32>
      %cst = arith.constant dense<0.000000e+00> : vector<64x256xf32>
      %18 = tpu.matmul %16, %17, %cst {dimension_numbers = #tpu.dot_dimension_numbers<[1], [0], [0], [1], [0, 0, 1, 1], [], []>} : vector<64x32xf32>, vector<32x256xf32>, vector<64x256xf32> -> vector<64x256xf32>
      %c0_11 = arith.constant 0 : index
      %c0_12 = arith.constant 0 : index
      %19 = vector.load %arg6[%c0_11, %c0_12] : memref<1x256xf32, #tpu.memory_space<vmem>>, vector<1x256xf32>
      %20 = vector.broadcast %19 : vector<1x256xf32> to vector<64x256xf32>
      %21 = arith.addf %18, %20 : vector<64x256xf32>
      %22 = vector.extract_strided_slice %21 {offsets = [0, 0], sizes = [64, 128], strides = [1, 1]} : vector<64x256xf32> to vector<64x128xf32>
      %23 = math.tanh %22 : vector<64x128xf32>
      %24 = vector.extract_strided_slice %21 {offsets = [0, 128], sizes = [64, 128], strides = [1, 1]} : vector<64x256xf32> to vector<64x128xf32>
      %cst_13 = arith.constant 5.000000e-01 : f32
      %25 = vector.broadcast %cst_13 : f32 to vector<64x128xf32>
      %26 = arith.mulf %25, %24 : vector<64x128xf32>
      %27 = math.tanh %26 : vector<64x128xf32>
      %cst_14 = arith.constant 1.000000e+00 : f32
      %28 = vector.broadcast %cst_14 : f32 to vector<64x128xf32>
      %29 = arith.addf %27, %28 : vector<64x128xf32>
      %cst_15 = arith.constant 5.000000e-01 : f32
      %30 = vector.broadcast %cst_15 : f32 to vector<64x128xf32>
      %31 = arith.mulf %30, %29 : vector<64x128xf32>
      %32 = arith.mulf %23, %31 : vector<64x128xf32>
      %c0_16 = arith.constant 0 : index
      %c0_17 = arith.constant 0 : index
      %33 = vector.load %arg7[%c0_16, %c0_17] : memref<1x128xf32, #tpu.memory_space<vmem>>, vector<1x128xf32>
      %34 = vector.broadcast %33 : vector<1x128xf32> to vector<64x128xf32>
      %35 = arith.mulf %32, %34 : vector<64x128xf32>
      %cst_18 = arith.constant dense<0.000000e+00> : vector<64xf32>
      %36 = vector.multi_reduction <add>, %35, %cst_18 [1] : vector<64x128xf32> to vector<64xf32>
      %37 = vector.shape_cast %36 : vector<64xf32> to vector<64x1xf32>
      %c0_19 = arith.constant 0 : index
      %38 = memref.load %arg8[%c0_19] : memref<1xf32, #tpu.memory_space<smem>>
      %39 = vector.broadcast %38 : f32 to vector<64x1xf32>
      %40 = arith.addf %37, %39 : vector<64x1xf32>
      %41 = vector.shape_cast %40 : vector<64x1xf32> to vector<8x8x1xf32>
      %cst_20 = arith.constant 0.000000e+00 : f32
      %42 = vector.broadcast %cst_20 : f32 to vector<8x8x1xf32>
      %43 = arith.cmpf ogt, %15, %42 : vector<8x8x1xf32>
      %cst_21 = arith.constant -1.000000e+30 : f32
      %44 = vector.broadcast %cst_21 : f32 to vector<8x8x1xf32>
      %45 = arith.select %43, %41, %44 : vector<8x8x1xi1>, vector<8x8x1xf32>
      %c0_22 = arith.constant 0 : index
      %c0_23 = arith.constant 0 : index
      %46 = vector.load %arg12[%c0_22, %c0_23] : memref<8x1xf32, #tpu.memory_space<vmem>>, vector<8x1xf32>
      %cst_24 = arith.constant dense<0xFF800000> : vector<8x1xf32>
      %47 = vector.multi_reduction <maximumf>, %45, %cst_24 [1] : vector<8x8x1xf32> to vector<8x1xf32>
      %48 = arith.maximumf %46, %47 : vector<8x1xf32>
      %49 = arith.subf %46, %48 : vector<8x1xf32>
      %50 = math.exp %49 : vector<8x1xf32>
      %51 = vector.shape_cast %48 : vector<8x1xf32> to vector<8x1x1xf32>
      %52 = vector.broadcast %51 : vector<8x1x1xf32> to vector<8x8x1xf32>
      %53 = arith.subf %45, %52 : vector<8x8x1xf32>
      %54 = math.exp %53 : vector<8x8x1xf32>
      %55 = arith.mulf %54, %15 : vector<8x8x1xf32>
      %c0_25 = arith.constant 0 : index
      %c0_26 = arith.constant 0 : index
      %56 = vector.load %arg13[%c0_25, %c0_26] : memref<8x1xf32, #tpu.memory_space<vmem>>, vector<8x1xf32>
      %57 = arith.mulf %50, %56 : vector<8x1xf32>
      %cst_27 = arith.constant dense<0.000000e+00> : vector<8x1xf32>
      %58 = vector.multi_reduction <add>, %55, %cst_27 [1] : vector<8x8x1xf32> to vector<8x1xf32>
      %59 = arith.addf %57, %58 : vector<8x1xf32>
      %c0_28 = arith.constant 0 : index
      %c0_29 = arith.constant 0 : index
      %60 = vector.load %arg13[%c0_28, %c0_29] : memref<8x1xf32, #tpu.memory_space<vmem>>, vector<8x1xf32>
      tpu.vector_store %arg13[%c0_28, %c0_29], %59 {strides = array<i32>} : memref<8x1xf32, #tpu.memory_space<vmem>>, vector<8x1xf32>,
      %61 = vector.broadcast %55 : vector<8x8x1xf32> to vector<8x8x32xf32>
      %62 = arith.mulf %61, %13 : vector<8x8x32xf32>
      %c0_30 = arith.constant 0 : index
      %c0_31 = arith.constant 0 : index
      %63 = vector.load %arg14[%c0_30, %c0_31] : memref<8x32xf32, #tpu.memory_space<vmem>>, vector<8x32xf32>
      %64 = vector.broadcast %50 : vector<8x1xf32> to vector<8x32xf32>
      %65 = arith.mulf %64, %63 : vector<8x32xf32>
      %cst_32 = arith.constant dense<0.000000e+00> : vector<8x32xf32>
      %66 = vector.multi_reduction <add>, %62, %cst_32 [1] : vector<8x8x32xf32> to vector<8x32xf32>
      %67 = arith.addf %65, %66 : vector<8x32xf32>
      %c0_33 = arith.constant 0 : index
      %c0_34 = arith.constant 0 : index
      %68 = vector.load %arg14[%c0_33, %c0_34] : memref<8x32xf32, #tpu.memory_space<vmem>>, vector<8x32xf32>
      tpu.vector_store %arg14[%c0_33, %c0_34], %67 {strides = array<i32>} : memref<8x32xf32, #tpu.memory_space<vmem>>, vector<8x32xf32>,
      %c0_35 = arith.constant 0 : index
      %c0_36 = arith.constant 0 : index
      %69 = vector.load %arg12[%c0_35, %c0_36] : memref<8x1xf32, #tpu.memory_space<vmem>>, vector<8x1xf32>
      tpu.vector_store %arg12[%c0_35, %c0_36], %48 {strides = array<i32>} : memref<8x1xf32, #tpu.memory_space<vmem>>, vector<8x1xf32>,
    } else {
    }
    %c0_i32_3 = arith.constant 0 : i32
    %10 = arith.cmpi eq, %arg1, %c0_i32_3 : i32
    %11 = arith.extui %10 : i1 to i32
    %c0_i32_4 = arith.constant 0 : i32
    %12 = arith.cmpi ne, %11, %c0_i32_4 : i32
    scf.if %12 {
      %c0 = arith.constant 0 : index
      %c0_5 = arith.constant 0 : index
      %13 = vector.load %arg13[%c0, %c0_5] : memref<8x1xf32, #tpu.memory_space<vmem>>, vector<8x1xf32>
      %cst = arith.constant 0.000000e+00 : f32
      %14 = vector.broadcast %cst : f32 to vector<8x1xf32>
      %15 = arith.cmpf ogt, %13, %14 : vector<8x1xf32>
      %cst_6 = arith.constant 1.000000e+00 : f32
      %16 = vector.broadcast %cst_6 : f32 to vector<8x1xf32>
      %17 = arith.select %15, %13, %16 : vector<8x1xi1>, vector<8x1xf32>
      %18 = tpu.reciprocal %17 {approx = true} : vector<8x1xf32> -> vector<8x1xf32>
      %19 = arith.mulf %17, %18 : vector<8x1xf32>
      %cst_7 = arith.constant 2.000000e+00 : f32
      %20 = vector.broadcast %cst_7 : f32 to vector<8x1xf32>
      %21 = arith.subf %20, %19 : vector<8x1xf32>
      %22 = arith.mulf %18, %21 : vector<8x1xf32>
      %c0_8 = arith.constant 0 : index
      %c0_9 = arith.constant 0 : index
      %23 = vector.load %arg14[%c0_8, %c0_9] : memref<8x32xf32, #tpu.memory_space<vmem>>, vector<8x32xf32>
      %24 = vector.broadcast %22 : vector<8x1xf32> to vector<8x32xf32>
      %25 = arith.mulf %23, %24 : vector<8x32xf32>
      %cst_10 = arith.constant 0.000000e+00 : f32
      %26 = vector.shape_cast %15 : vector<8x1xi1> to vector<8x1xi1>
      %27 = vector.broadcast %26 : vector<8x1xi1> to vector<8x32xi1>
      %28 = vector.broadcast %cst_10 : f32 to vector<8x32xf32>
      %29 = arith.select %27, %25, %28 : vector<8x32xi1>, vector<8x32xf32>
      %c0_11 = arith.constant 0 : index
      %c0_12 = arith.constant 0 : index
      %30 = vector.load %arg9[%c0_11, %c0_12] : memref<32x128xf32, #tpu.memory_space<vmem>>, vector<32x128xf32>
      %cst_13 = arith.constant dense<0.000000e+00> : vector<8x128xf32>
      %31 = tpu.matmul %29, %30, %cst_13 {dimension_numbers = #tpu.dot_dimension_numbers<[1], [0], [0], [1], [0, 0, 1, 1], [], []>} : vector<8x32xf32>, vector<32x128xf32>, vector<8x128xf32> -> vector<8x128xf32>
      %c0_14 = arith.constant 0 : index
      %c0_15 = arith.constant 0 : index
      %32 = vector.load %arg10[%c0_14, %c0_15] : memref<1x128xf32, #tpu.memory_space<vmem>>, vector<1x128xf32>
      %33 = vector.broadcast %32 : vector<1x128xf32> to vector<8x128xf32>
      %34 = arith.addf %31, %33 : vector<8x128xf32>
      %c0_16 = arith.constant 0 : index
      %c0_17 = arith.constant 0 : index
      %35 = vector.load %arg11[%c0_16, %c0_17] : memref<8x128xf32, #tpu.memory_space<vmem>>, vector<8x128xf32>
      tpu.vector_store %arg11[%c0_16, %c0_17], %34 {strides = array<i32>} : memref<8x128xf32, #tpu.memory_space<vmem>>, vector<8x128xf32>,
    } else {
    }
    return
  }
  func.func @transform_0(%arg0: i32, %arg1: i32, %arg2: memref<1xi32, #tpu.memory_space<smem>>) -> (i32, i32, i32) {
    %c0_i32 = arith.constant 0 : i32
    %c0_i32_0 = arith.constant 0 : i32
    return %arg0, %arg1, %c0_i32 : i32, i32, i32
  }
  func.func @transform_1(%arg0: i32, %arg1: i32, %arg2: memref<1xi32, #tpu.memory_space<smem>>) -> (i32, i32) {
    %c0_i32 = arith.constant 0 : i32
    return %arg0, %arg1 : i32, i32
  }
  func.func @transform_2(%arg0: i32, %arg1: i32, %arg2: memref<1xi32, #tpu.memory_space<smem>>) -> (i32, i32) {
    %c0_i32 = arith.constant 0 : i32
    %c0_i32_0 = arith.constant 0 : i32
    %c0_i32_1 = arith.constant 0 : i32
    return %c0_i32, %c0_i32_0 : i32, i32
  }
  func.func @transform_3(%arg0: i32, %arg1: i32, %arg2: memref<1xi32, #tpu.memory_space<smem>>) -> (i32, i32) {
    %c0_i32 = arith.constant 0 : i32
    %c0_i32_0 = arith.constant 0 : i32
    %c0_i32_1 = arith.constant 0 : i32
    return %c0_i32, %c0_i32_0 : i32, i32
  }
  func.func @transform_4(%arg0: i32, %arg1: i32, %arg2: memref<1xi32, #tpu.memory_space<smem>>) -> (i32, i32) {
    %c0_i32 = arith.constant 0 : i32
    %c0_i32_0 = arith.constant 0 : i32
    %c0_i32_1 = arith.constant 0 : i32
    return %c0_i32, %c0_i32_0 : i32, i32
  }
  func.func @transform_5(%arg0: i32, %arg1: i32, %arg2: memref<1xi32, #tpu.memory_space<smem>>) -> i32 {
    %c0_i32 = arith.constant 0 : i32
    %c0_i32_0 = arith.constant 0 : i32
    return %c0_i32 : i32
  }
  func.func @transform_6(%arg0: i32, %arg1: i32, %arg2: memref<1xi32, #tpu.memory_space<smem>>) -> (i32, i32) {
    %c0_i32 = arith.constant 0 : i32
    %c0_i32_0 = arith.constant 0 : i32
    %c0_i32_1 = arith.constant 0 : i32
    return %c0_i32, %c0_i32_0 : i32, i32
  }
  func.func @transform_7(%arg0: i32, %arg1: i32, %arg2: memref<1xi32, #tpu.memory_space<smem>>) -> (i32, i32) {
    %c0_i32 = arith.constant 0 : i32
    %c0_i32_0 = arith.constant 0 : i32
    %c0_i32_1 = arith.constant 0 : i32
    return %c0_i32, %c0_i32_0 : i32, i32
  }
  func.func @transform_8(%arg0: i32, %arg1: i32, %arg2: memref<1xi32, #tpu.memory_space<smem>>) -> (i32, i32) {
    %c0_i32 = arith.constant 0 : i32
    %c0_i32_0 = arith.constant 0 : i32
    return %arg0, %c0_i32 : i32, i32
  }
}

</mosaic_0001>

<llo_original>
// kernel: _run_kernel.1
$region0: #{_run_kernel.1}
  #allocation0 [shape = 'u32[]', space=smem, size = 0x4, offset = 0x4, fixed_abs, tag = 'smem constant byte address 0x4 - core index']
  #allocation1 [shape = 'u32[72,128]{1,0:T(1,128)}', space=vmem, size = 0x9000, scoped, tag = 'internal scratch']
  #allocation2 [shape = 'f32[8,1]{1,0:T(8,128)}', space=vmem, size = 0x1000, scoped, tag = 'scratch operand']
  #allocation3 [shape = 'f32[8,1]{1,0:T(8,128)}', space=vmem, size = 0x1000, scoped, tag = 'scratch operand']
  #allocation4 [shape = 'f32[8,32]{1,0:T(8,128)}', space=vmem, size = 0x1000, scoped, tag = 'scratch operand']
  #allocation5 [shape = 's32[1]{0}', space=sflag, size = 0x4, scoped, tag = 'scoped memory for _run_kernel.1']
  #allocation6 [shape = 's32[1]{0:T(128)S(6)}', space=smem, size = 0x200, scoped, tag = 'prefetched SMEM operand 0']
  #allocation7 [shape = 'f32[1]{0:T(128)S(6)}', space=smem, size = 0x200, scoped, tag = 'scoped memory for _run_kernel.1']
  %s0 = inlined_call_operand.<no memory space> [shape: s32[1], index: 0, kind: input, shape index: {}]
  %s1 = inlined_call_operand.vmem [shape: f32[8,8,32], index: 1, kind: input, shape index: {}]
  %s2 = inlined_call_operand.vmem [shape: f32[8,8], index: 2, kind: input, shape index: {}]
  %s3 = inlined_call_operand.vmem [shape: f32[32,256], index: 3, kind: input, shape index: {}]
  %s4 = inlined_call_operand.vmem [shape: f32[1,256], index: 4, kind: input, shape index: {}]
  %s5 = inlined_call_operand.vmem [shape: f32[1,128], index: 5, kind: input, shape index: {}]
  %s6 = inlined_call_operand.<no memory space> [shape: f32[1], index: 6, kind: input, shape index: {}]
  %s7 = inlined_call_operand.vmem [shape: f32[32,128], index: 7, kind: input, shape index: {}]
  %s8 = inlined_call_operand.vmem [shape: f32[1,128], index: 8, kind: input, shape index: {}]
  %s9 = inlined_call_operand.vmem [shape: f32[8,128], index: 9, kind: output, shape index: {}]
  %s10 = sld [smem:[#allocation0]]
  $region54: #{_run_kernel.1} parent=0
    _
  %s12 = ssub.s32 1, %s10
  %s13 = scalar_select 0, %s12, %s10
  %14 = sst [smem:[#allocation6]] %s0
  %15 = sst [smem:[#allocation7]] %s6
  // Predicated region
  $region2: #{_run_kernel.1} parent=0 // pred_check
    _
  $region3: #{_run_kernel.1} parent=0 // pred_check_branch
    %17 = sbr.rel (0) target = $region5
  $region4: #{_run_kernel.1} parent=0 // pred_region
    _
  $region5: #{_run_kernel.1} parent=0 // pred_fallthru
    _
  // Predicated region
  $region6: #{_run_kernel.1} parent=0 // pred_check
    _
  $region7: #{_run_kernel.1} parent=0 // pred_check_branch
    %19 = sbr.rel (0) target = $region9
  $region8: #{_run_kernel.1} parent=0 // pred_region
    _
  $region9: #{_run_kernel.1} parent=0 // pred_fallthru
    _
  // Predicated region
  $region10: #{_run_kernel.1} parent=0 // pred_check
    _
  $region11: #{_run_kernel.1} parent=0 // pred_check_branch
    %21 = sbr.rel (0) target = $region13
  $region12: #{_run_kernel.1} parent=0 // pred_region
    _
  $region13: #{_run_kernel.1} parent=0 // pred_fallthru
    _
  // Predicated region
  $region14: #{_run_kernel.1} parent=0 // pred_check
    _
  $region15: #{_run_kernel.1} parent=0 // pred_check_branch
    %23 = sbr.rel (0) target = $region17
  $region16: #{_run_kernel.1} parent=0 // pred_region
    _
  $region17: #{_run_kernel.1} parent=0 // pred_fallthru
    _
  // Predicated region
  $region18: #{_run_kernel.1} parent=0 // pred_check
    _
  $region19: #{_run_kernel.1} parent=0 // pred_check_branch
    %25 = sbr.rel (0) target = $region21
  $region20: #{_run_kernel.1} parent=0 // pred_region
    _
  $region21: #{_run_kernel.1} parent=0 // pred_fallthru
    _
  // Predicated region
  $region22: #{_run_kernel.1} parent=0 // pred_check
    _
  $region23: #{_run_kernel.1} parent=0 // pred_check_branch
    %27 = sbr.rel (0) target = $region25
  $region24: #{_run_kernel.1} parent=0 // pred_region
    _
  $region25: #{_run_kernel.1} parent=0 // pred_fallthru
    _
  // Predicated region
  $region26: #{_run_kernel.1} parent=0 // pred_check
    _
  $region27: #{_run_kernel.1} parent=0 // pred_check_branch
    %29 = sbr.rel (0) target = $region29
  $region28: #{_run_kernel.1} parent=0 // pred_region
    _
  $region29: #{_run_kernel.1} parent=0 // pred_fallthru
    _
  // Predicated region
  $region30: #{_run_kernel.1} parent=0 // pred_check
    _
  $region31: #{_run_kernel.1} parent=0 // pred_check_branch
    %31 = sbr.rel (0) target = $region33
  $region32: #{_run_kernel.1} parent=0 // pred_region
    _
  $region33: #{_run_kernel.1} parent=0 // pred_fallthru
    _
  %p32 = scmp.eq.s32.totalorder 0, 0
  // Predicated region
  $region34: #{_run_kernel.1} parent=0 // pred_check
    %p33 = pneg %p32
  $region35: #{_run_kernel.1} parent=0 // pred_check_branch
    %35 = sbr.rel (%p33) target = $region37
  $region36: #{_run_kernel.1} parent=0 // pred_region
    %vm36 = vcmask 7168
    %37 = vst.msk [vmem:[#allocation2] sm:$0xff] %vm36, -1e+30
    %38 = vst.msk [vmem:[#allocation3] sm:$0xff] %vm36, 0.0
    %vm39 = vcmask 261120
    %40 = vst.msk [vmem:[#allocation4] sm:$0xff] %vm39, 0.0
  $region37: #{_run_kernel.1} parent=0 // pred_fallthru
    _
  %s41 = sadd.s32 0, 0
  %s42 = sld [smem:[#allocation6 + %s41]]
  %p43 = scmp.gt.s32.totalorder %s42, 0
  // Predicated region
  $region38: #{_run_kernel.1} parent=0 // pred_check
    %p44 = pneg %p43
  $region39: #{_run_kernel.1} parent=0 // pred_check_branch
    %46 = sbr.rel (%p44) target = $region41
  $region40: #{_run_kernel.1} parent=0 // pred_region
    %v47 = vld [vmem:[%s1] sm:$0xff]
    %v48 = vld [vmem:[%s1 + $0x8] sm:$0xff]
    %v49 = vld [vmem:[%s1 + $0x10] sm:$0xff]
    %v50 = vld [vmem:[%s1 + $0x18] sm:$0xff]
    %v51 = vld [vmem:[%s1 + $0x20] sm:$0xff]
    %v52 = vld [vmem:[%s1 + $0x28] sm:$0xff]
    %v53 = vld [vmem:[%s1 + $0x30] sm:$0xff]
    %v54 = vld [vmem:[%s1 + $0x38] sm:$0xff]
    %v55 = vld [vmem:[%s2] sm:$0xff]
    %v56 = vperm.slane %v55, 0
    %v57 = vlaneseq
    %v58 = vshrl.u32 %v57, 7
    %60 = vset.pattern.permute.xlu0 %v58
    %61 = vperm.xlu0 %60, %v56
    %v62 = vpop.permute.xlu0 %61
    %v63 = vperm.slane %v55, 1
    %v64 = vlaneseq
    %v65 = vshrl.u32 %v64, 7
    %67 = vset.pattern.permute.xlu0 %v65
    %68 = vperm.xlu0 %67, %v63
    %v69 = vpop.permute.xlu0 %68
    %v70 = vperm.slane %v55, 2
    %v71 = vlaneseq
    %v72 = vshrl.u32 %v71, 7
    %74 = vset.pattern.permute.xlu0 %v72
    %75 = vperm.xlu0 %74, %v70
    %v76 = vpop.permute.xlu0 %75
    %v77 = vperm.slane %v55, 3
    %v78 = vlaneseq
    %v79 = vshrl.u32 %v78, 7
    %81 = vset.pattern.permute.xlu0 %v79
    %82 = vperm.xlu0 %81, %v77
    %v83 = vpop.permute.xlu0 %82
    %v84 = vperm.slane %v55, 4
    %v85 = vlaneseq
    %v86 = vshrl.u32 %v85, 7
    %88 = vset.pattern.permute.xlu0 %v86
    %89 = vperm.xlu0 %88, %v84
    %v90 = vpop.permute.xlu0 %89
    %v91 = vperm.slane %v55, 5
    %v92 = vlaneseq
    %v93 = vshrl.u32 %v92, 7
    %95 = vset.pattern.permute.xlu0 %v93
    %96 = vperm.xlu0 %95, %v91
    %v97 = vpop.permute.xlu0 %96
    %v98 = vperm.slane %v55, 6
    %v99 = vlaneseq
    %v100 = vshrl.u32 %v99, 7
    %102 = vset.pattern.permute.xlu0 %v100
    %103 = vperm.xlu0 %102, %v98
    %v104 = vpop.permute.xlu0 %103
    %v105 = vperm.slane %v55, 7
    %v106 = vlaneseq
    %v107 = vshrl.u32 %v106, 7
    %109 = vset.pattern.permute.xlu0 %v107
    %110 = vperm.xlu0 %109, %v105
    %v111 = vpop.permute.xlu0 %110
    %v112 = vld [vmem:[%s3] sm:$0xff]
    %v113 = vld [vmem:[%s3 + $0x8] sm:$0xff]
    %v114 = vld [vmem:[%s3 + $0x10] sm:$0xff]
    %v115 = vld [vmem:[%s3 + $0x18] sm:$0xff]
    %v116 = vld [vmem:[%s3 + $0x20] sm:$0xff]
    %v117 = vld [vmem:[%s3 + $0x28] sm:$0xff]
    %v118 = vld [vmem:[%s3 + $0x30] sm:$0xff]
    %v119 = vld [vmem:[%s3 + $0x38] sm:$0xff]
    %v120 = vld [vmem:[%s4] sm:$0x3]
    %v122 = vperm.slane %v120, 0
    %v123 = vperm.slane %v120, 1
    %vm126 = vcmask 261120
    %v128 = vsel %vm126, %v47, 0
    %v131 = vsel %vm126, %v48, 0
    %v134 = vsel %vm126, %v49, 0
    %v137 = vsel %vm126, %v50, 0
    %v140 = vsel %vm126, %v51, 0
    %v143 = vsel %vm126, %v52, 0
    %v146 = vsel %vm126, %v53, 0
    %v149 = vsel %vm126, %v54, 0
    %151 = vmatpush.msra.mxu0 0.0
    %152 = vmatpush.msra.mxu0 0.0
    %153 = vmatpush.msra.mxu0 0.0
    %154 = vmatpush.msra.mxu0 0.0
    %155 = vmatpush.msra.mxu0 0.0
    %156 = vmatpush.msra.mxu0 0.0
    %157 = vmatpush.msra.mxu0 0.0
    %158 = vmatpush.msra.mxu0 0.0
    %159 = vmatpush.msra.mxu0 0.0
    %160 = vmatpush.msra.mxu0 0.0
    %161 = vmatpush.msra.mxu0 0.0
    %162 = vmatpush.msra.mxu0 0.0
    %163 = vmatpush.msra.mxu0 %v118
    %164 = vmatpush.msra.mxu0 %v116
    %165 = vmatpush.msra.mxu0 %v114
    %166 = vmatpush.msra.mxu0 %v112
    %167 = vmatmul.f32.gmra.mxu0 %v128
    %v168 = vpop.f32.mrf.mxu0
    %v169 = vadd.f32 %v122, %v168
    %170 = vmatmul.f32.gmra.mxu0 %v131
    %v171 = vpop.f32.mrf.mxu0
    %v172 = vadd.f32 %v122, %v171
    %173 = vmatmul.f32.gmra.mxu0 %v134
    %v174 = vpop.f32.mrf.mxu0
    %v175 = vadd.f32 %v122, %v174
    %176 = vmatmul.f32.gmra.mxu0 %v137
    %v177 = vpop.f32.mrf.mxu0
    %v178 = vadd.f32 %v122, %v177
    %179 = vmatmul.f32.gmra.mxu0 %v140
    %v180 = vpop.f32.mrf.mxu0
    %v181 = vadd.f32 %v122, %v180
    %182 = vmatmul.f32.gmra.mxu0 %v143
    %v183 = vpop.f32.mrf.mxu0
    %v184 = vadd.f32 %v122, %v183
    %185 = vmatmul.f32.gmra.mxu0 %v146
    %v186 = vpop.f32.mrf.mxu0
    %v187 = vadd.f32 %v122, %v186
    %188 = vmatmul.f32.gmra.mxu0 %v149
    %v189 = vpop.f32.mrf.mxu0
    %v190 = vadd.f32 %v122, %v189
    %191 = vdwg.mxu0
    %192 = vmatpush.msra.mxu0 0.0
    %193 = vmatpush.msra.mxu0 0.0
    %194 = vmatpush.msra.mxu0 0.0
    %195 = vmatpush.msra.mxu0 0.0
    %196 = vmatpush.msra.mxu0 0.0
    %197 = vmatpush.msra.mxu0 0.0
    %198 = vmatpush.msra.mxu0 0.0
    %199 = vmatpush.msra.mxu0 0.0
    %200 = vmatpush.msra.mxu0 0.0
    %201 = vmatpush.msra.mxu0 0.0
    %202 = vmatpush.msra.mxu0 0.0
    %203 = vmatpush.msra.mxu0 0.0
    %204 = vmatpush.msra.mxu0 %v119
    %205 = vmatpush.msra.mxu0 %v117
    %206 = vmatpush.msra.mxu0 %v115
    %207 = vmatpush.msra.mxu0 %v113
    %208 = vmatmul.f32.gmra.mxu0 %v128
    %v209 = vpop.f32.mrf.mxu0
    %v210 = vadd.f32 %v123, %v209
    %211 = vmatmul.f32.gmra.mxu0 %v131
    %v212 = vpop.f32.mrf.mxu0
    %v213 = vadd.f32 %v123, %v212
    %214 = vmatmul.f32.gmra.mxu0 %v134
    %v215 = vpop.f32.mrf.mxu0
    %v216 = vadd.f32 %v123, %v215
    %217 = vmatmul.f32.gmra.mxu0 %v137
    %v218 = vpop.f32.mrf.mxu0
    %v219 = vadd.f32 %v123, %v218
    %220 = vmatmul.f32.gmra.mxu0 %v140
    %v221 = vpop.f32.mrf.mxu0
    %v222 = vadd.f32 %v123, %v221
    %223 = vmatmul.f32.gmra.mxu0 %v143
    %v224 = vpop.f32.mrf.mxu0
    %v225 = vadd.f32 %v123, %v224
    %226 = vmatmul.f32.gmra.mxu0 %v146
    %v227 = vpop.f32.mrf.mxu0
    %v228 = vadd.f32 %v123, %v227
    %229 = vmatmul.f32.gmra.mxu0 %v149
    %v230 = vpop.f32.mrf.mxu0
    %v231 = vadd.f32 %v123, %v230
    %232 = vdwg.mxu0
    %v233 = vtanh.pop %v169
    %v234 = vtanh.pop %v172
    %v235 = vtanh.pop %v175
    %v236 = vtanh.pop %v178
    %v237 = vtanh.pop %v181
    %v238 = vtanh.pop %v184
    %v239 = vtanh.pop %v187
    %v240 = vtanh.pop %v190
    %v241 = vmul.f32 %v210, 0.5
    %v242 = vmul.f32 %v213, 0.5
    %v243 = vmul.f32 %v216, 0.5
    %v244 = vmul.f32 %v219, 0.5
    %v245 = vmul.f32 %v222, 0.5
    %v246 = vmul.f32 %v225, 0.5
    %v247 = vmul.f32 %v228, 0.5
    %v248 = vmul.f32 %v231, 0.5
    %v249 = vtanh.pop %v241
    %v250 = vtanh.pop %v242
    %v251 = vtanh.pop %v243
    %v252 = vtanh.pop %v244
    %v253 = vtanh.pop %v245
    %v254 = vtanh.pop %v246
    %v255 = vtanh.pop %v247
    %v256 = vtanh.pop %v248
    %v257 = vadd.f32 %v249, 1.0
    %v258 = vadd.f32 %v250, 1.0
    %v259 = vadd.f32 %v251, 1.0
    %v260 = vadd.f32 %v252, 1.0
    %v261 = vadd.f32 %v253, 1.0
    %v262 = vadd.f32 %v254, 1.0
    %v263 = vadd.f32 %v255, 1.0
    %v264 = vadd.f32 %v256, 1.0
    %v265 = vmul.f32 %v257, 0.5
    %v266 = vmul.f32 %v258, 0.5
    %v267 = vmul.f32 %v259, 0.5
    %v268 = vmul.f32 %v260, 0.5
    %v269 = vmul.f32 %v261, 0.5
    %v270 = vmul.f32 %v262, 0.5
    %v271 = vmul.f32 %v263, 0.5
    %v272 = vmul.f32 %v264, 0.5
    %v273 = vmul.f32 %v233, %v265
    %v274 = vmul.f32 %v234, %v266
    %v275 = vmul.f32 %v235, %v267
    %v276 = vmul.f32 %v236, %v268
    %v277 = vmul.f32 %v237, %v269
    %v278 = vmul.f32 %v238, %v270
    %v279 = vmul.f32 %v239, %v271
    %v280 = vmul.f32 %v240, %v272
    %v281 = vld [vmem:[%s5] sm:$0x1]
    %v283 = vperm.slane %v281, 0
    %v285 = vmul.f32 %v273, %v283
    %v286 = vmul.f32 %v274, %v283
    %v287 = vmul.f32 %v275, %v283
    %v288 = vmul.f32 %v276, %v283
    %v289 = vmul.f32 %v277, %v283
    %v290 = vmul.f32 %v278, %v283
    %v291 = vmul.f32 %v279, %v283
    %v292 = vmul.f32 %v280, %v283
    %293 = vadd.xlane.f32.xlu0 %v285
    %v294 = vpop.xlane.xlu0 %293
    %295 = vadd.xlane.f32.xlu0 %v286
    %v296 = vpop.xlane.xlu0 %295
    %297 = vadd.xlane.f32.xlu0 %v287
    %v298 = vpop.xlane.xlu0 %297
    %299 = vadd.xlane.f32.xlu0 %v288
    %v300 = vpop.xlane.xlu0 %299
    %301 = vadd.xlane.f32.xlu0 %v289
    %v302 = vpop.xlane.xlu0 %301
    %303 = vadd.xlane.f32.xlu0 %v290
    %v304 = vpop.xlane.xlu0 %303
    %305 = vadd.xlane.f32.xlu0 %v291
    %v306 = vpop.xlane.xlu0 %305
    %307 = vadd.xlane.f32.xlu0 %v292
    %v308 = vpop.xlane.xlu0 %307
    %s309 = sld [smem:[#allocation7]]
    %v310 = vstv %s309
    %v311 = vadd.f32 %v294, %v310
    %v312 = vadd.f32 %v296, %v310
    %v313 = vadd.f32 %v298, %v310
    %v314 = vadd.f32 %v300, %v310
    %v315 = vadd.f32 %v302, %v310
    %v316 = vadd.f32 %v304, %v310
    %v317 = vadd.f32 %v306, %v310
    %v318 = vadd.f32 %v308, %v310
    %vm319 = vcmp.gt.f32.partialorder %v62, 0.0
    %vm320 = vcmp.gt.f32.partialorder %v69, 0.0
    %vm321 = vcmp.gt.f32.partialorder %v76, 0.0
    %vm322 = vcmp.gt.f32.partialorder %v83, 0.0
    %vm323 = vcmp.gt.f32.partialorder %v90, 0.0
    %vm324 = vcmp.gt.f32.partialorder %v97, 0.0
    %vm325 = vcmp.gt.f32.partialorder %v104, 0.0
    %vm326 = vcmp.gt.f32.partialorder %v111, 0.0
    %v327 = vsel %vm319, %v311, -1e+30
    %v328 = vsel %vm320, %v312, -1e+30
    %v329 = vsel %vm321, %v313, -1e+30
    %v330 = vsel %vm322, %v314, -1e+30
    %v331 = vsel %vm323, %v315, -1e+30
    %v332 = vsel %vm324, %v316, -1e+30
    %v333 = vsel %vm325, %v317, -1e+30
    %v334 = vsel %vm326, %v318, -1e+30
    %v335 = vld [vmem:[#allocation2] sm:$0xff]
    %v336 = vrot.slane %v327, 4
    %v337 = vmax.f32 %v327, %v336
    %v338 = vrot.slane %v337, 2
    %v339 = vmax.f32 %v337, %v338
    %v340 = vrot.slane %v339, 1
    %v341 = vmax.f32 %v339, %v340
    %v342 = vrot.slane %v328, 4
    %v343 = vmax.f32 %v328, %v342
    %v344 = vrot.slane %v343, 2
    %v345 = vmax.f32 %v343, %v344
    %v346 = vrot.slane %v345, 1
    %v347 = vmax.f32 %v345, %v346
    %v348 = vrot.slane %v329, 4
    %v349 = vmax.f32 %v329, %v348
    %v350 = vrot.slane %v349, 2
    %v351 = vmax.f32 %v349, %v350
    %v352 = vrot.slane %v351, 1
    %v353 = vmax.f32 %v351, %v352
    %v354 = vrot.slane %v330, 4
    %v355 = vmax.f32 %v330, %v354
    %v356 = vrot.slane %v355, 2
    %v357 = vmax.f32 %v355, %v356
    %v358 = vrot.slane %v357, 1
    %v359 = vmax.f32 %v357, %v358
    %v360 = vrot.slane %v331, 4
    %v361 = vmax.f32 %v331, %v360
    %v362 = vrot.slane %v361, 2
    %v363 = vmax.f32 %v361, %v362
    %v364 = vrot.slane %v363, 1
    %v365 = vmax.f32 %v363, %v364
    %v366 = vrot.slane %v332, 4
    %v367 = vmax.f32 %v332, %v366
    %v368 = vrot.slane %v367, 2
    %v369 = vmax.f32 %v367, %v368
    %v370 = vrot.slane %v369, 1
    %v371 = vmax.f32 %v369, %v370
    %v372 = vrot.slane %v333, 4
    %v373 = vmax.f32 %v333, %v372
    %v374 = vrot.slane %v373, 2
    %v375 = vmax.f32 %v373, %v374
    %v376 = vrot.slane %v375, 1
    %v377 = vmax.f32 %v375, %v376
    %v378 = vrot.slane %v334, 4
    %v379 = vmax.f32 %v334, %v378
    %v380 = vrot.slane %v379, 2
    %v381 = vmax.f32 %v379, %v380
    %v382 = vrot.slane %v381, 1
    %v383 = vmax.f32 %v381, %v382
    %vm392 = vcmask 1041409
    %v393 = vsel %vm392, %v347, %v341
    %vm394 = vcmask 1042434
    %v395 = vsel %vm394, %v353, %v393
    %vm396 = vcmask 1043459
    %v397 = vsel %vm396, %v359, %v395
    %vm398 = vcmask 1044484
    %v399 = vsel %vm398, %v365, %v397
    %vm400 = vcmask 1045509
    %v401 = vsel %vm400, %v371, %v399
    %vm402 = vcmask 1046534
    %v403 = vsel %vm402, %v377, %v401
    %vm404 = vcmask 1047559
    %v405 = vsel %vm404, %v383, %v403
    %v407 = vmax.f32 %v335, %v405
    %v408 = vsub.f32 %v335, %v407
    %v409 = vmul.f32 %v408, 1.442695
    %v410 = vpow.pop %v409
    %v412 = vrot.slane %v407, 1
    %v413 = vrot.slane %v407, 2
    %v414 = vrot.slane %v407, 3
    %v415 = vrot.slane %v407, 4
    %v416 = vrot.slane %v407, 5
    %v417 = vrot.slane %v407, 6
    %v418 = vrot.slane %v407, 7
    %v419 = vperm.slane %v407, 0
    %v420 = vperm.slane %v412, 0
    %v421 = vperm.slane %v413, 0
    %v422 = vperm.slane %v414, 0
    %v423 = vperm.slane %v415, 0
    %v424 = vperm.slane %v416, 0
    %v425 = vperm.slane %v417, 0
    %v426 = vperm.slane %v418, 0
    %v435 = vsub.f32 %v327, %v419
    %v436 = vsub.f32 %v328, %v420
    %v437 = vsub.f32 %v329, %v421
    %v438 = vsub.f32 %v330, %v422
    %v439 = vsub.f32 %v331, %v423
    %v440 = vsub.f32 %v332, %v424
    %v441 = vsub.f32 %v333, %v425
    %v442 = vsub.f32 %v334, %v426
    %v443 = vmul.f32 %v435, 1.442695
    %v444 = vpow.pop %v443
    %v445 = vmul.f32 %v436, 1.442695
    %v446 = vpow.pop %v445
    %v447 = vmul.f32 %v437, 1.442695
    %v448 = vpow.pop %v447
    %v449 = vmul.f32 %v438, 1.442695
    %v450 = vpow.pop %v449
    %v451 = vmul.f32 %v439, 1.442695
    %v452 = vpow.pop %v451
    %v453 = vmul.f32 %v440, 1.442695
    %v454 = vpow.pop %v453
    %v455 = vmul.f32 %v441, 1.442695
    %v456 = vpow.pop %v455
    %v457 = vmul.f32 %v442, 1.442695
    %v458 = vpow.pop %v457
    %v459 = vmul.f32 %v444, %v62
    %v460 = vmul.f32 %v446, %v69
    %v461 = vmul.f32 %v448, %v76
    %v462 = vmul.f32 %v450, %v83
    %v463 = vmul.f32 %v452, %v90
    %v464 = vmul.f32 %v454, %v97
    %v465 = vmul.f32 %v456, %v104
    %v466 = vmul.f32 %v458, %v111
    %v467 = vld [vmem:[#allocation3] sm:$0xff]
    %v468 = vmul.f32 %v410, %v467
    %vm469 = vcmask 7168
    %v470 = vsel %vm469, %v459, 0.0
    %v471 = vrot.slane %v470, 4
    %v472 = vadd.f32 %v470, %v471
    %v473 = vrot.slane %v472, 2
    %v474 = vadd.f32 %v472, %v473
    %v475 = vrot.slane %v474, 1
    %v476 = vadd.f32 %v474, %v475
    %v477 = vsel %vm469, %v460, 0.0
    %v478 = vrot.slane %v477, 4
    %v479 = vadd.f32 %v477, %v478
    %v480 = vrot.slane %v479, 2
    %v481 = vadd.f32 %v479, %v480
    %v482 = vrot.slane %v481, 1
    %v483 = vadd.f32 %v481, %v482
    %v484 = vsel %vm469, %v461, 0.0
    %v485 = vrot.slane %v484, 4
    %v486 = vadd.f32 %v484, %v485
    %v487 = vrot.slane %v486, 2
    %v488 = vadd.f32 %v486, %v487
    %v489 = vrot.slane %v488, 1
    %v490 = vadd.f32 %v488, %v489
    %v491 = vsel %vm469, %v462, 0.0
    %v492 = vrot.slane %v491, 4
    %v493 = vadd.f32 %v491, %v492
    %v494 = vrot.slane %v493, 2
    %v495 = vadd.f32 %v493, %v494
    %v496 = vrot.slane %v495, 1
    %v497 = vadd.f32 %v495, %v496
    %v498 = vsel %vm469, %v463, 0.0
    %v499 = vrot.slane %v498, 4
    %v500 = vadd.f32 %v498, %v499
    %v501 = vrot.slane %v500, 2
    %v502 = vadd.f32 %v500, %v501
    %v503 = vrot.slane %v502, 1
    %v504 = vadd.f32 %v502, %v503
    %v505 = vsel %vm469, %v464, 0.0
    %v506 = vrot.slane %v505, 4
    %v507 = vadd.f32 %v505, %v506
    %v508 = vrot.slane %v507, 2
    %v509 = vadd.f32 %v507, %v508
    %v510 = vrot.slane %v509, 1
    %v511 = vadd.f32 %v509, %v510
    %v512 = vsel %vm469, %v465, 0.0
    %v513 = vrot.slane %v512, 4
    %v514 = vadd.f32 %v512, %v513
    %v515 = vrot.slane %v514, 2
    %v516 = vadd.f32 %v514, %v515
    %v517 = vrot.slane %v516, 1
    %v518 = vadd.f32 %v516, %v517
    %v519 = vsel %vm469, %v466, 0.0
    %v520 = vrot.slane %v519, 4
    %v521 = vadd.f32 %v519, %v520
    %v522 = vrot.slane %v521, 2
    %v523 = vadd.f32 %v521, %v522
    %v524 = vrot.slane %v523, 1
    %v525 = vadd.f32 %v523, %v524
    %v534 = vsel %vm392, %v483, %v476
    %v535 = vsel %vm394, %v490, %v534
    %v536 = vsel %vm396, %v497, %v535
    %v537 = vsel %vm398, %v504, %v536
    %v538 = vsel %vm400, %v511, %v537
    %v539 = vsel %vm402, %v518, %v538
    %v540 = vsel %vm404, %v525, %v539
    %v542 = vadd.f32 %v468, %v540
    %543 = vst.msk [vmem:[#allocation3] sm:$0xff] %vm469, %v542
    %545 = vset.pattern.permute.xlu0 0
    %546 = vperm.xlu0 %545, %v459
    %v547 = vpop.permute.xlu0 %546
    %550 = vset.pattern.permute.xlu0 0
    %551 = vperm.xlu0 %550, %v460
    %v552 = vpop.permute.xlu0 %551
    %555 = vset.pattern.permute.xlu0 0
    %556 = vperm.xlu0 %555, %v461
    %v557 = vpop.permute.xlu0 %556
    %560 = vset.pattern.permute.xlu0 0
    %561 = vperm.xlu0 %560, %v462
    %v562 = vpop.permute.xlu0 %561
    %565 = vset.pattern.permute.xlu0 0
    %566 = vperm.xlu0 %565, %v463
    %v567 = vpop.permute.xlu0 %566
    %570 = vset.pattern.permute.xlu0 0
    %571 = vperm.xlu0 %570, %v464
    %v572 = vpop.permute.xlu0 %571
    %575 = vset.pattern.permute.xlu0 0
    %576 = vperm.xlu0 %575, %v465
    %v577 = vpop.permute.xlu0 %576
    %580 = vset.pattern.permute.xlu0 0
    %581 = vperm.xlu0 %580, %v466
    %v582 = vpop.permute.xlu0 %581
    %v584 = vmul.f32 %v547, %v47
    %v585 = vmul.f32 %v552, %v48
    %v586 = vmul.f32 %v557, %v49
    %v587 = vmul.f32 %v562, %v50
    %v588 = vmul.f32 %v567, %v51
    %v589 = vmul.f32 %v572, %v52
    %v590 = vmul.f32 %v577, %v53
    %v591 = vmul.f32 %v582, %v54
    %v592 = vld [vmem:[#allocation4] sm:$0xff]
    %594 = vset.pattern.permute.xlu0 0
    %595 = vperm.xlu0 %594, %v410
    %v596 = vpop.permute.xlu0 %595
    %v598 = vmul.f32 %v596, %v592
    %v599 = vsel %vm126, %v584, 0.0
    %v600 = vrot.slane %v599, 4
    %v601 = vadd.f32 %v599, %v600
    %v602 = vrot.slane %v601, 2
    %v603 = vadd.f32 %v601, %v602
    %v604 = vrot.slane %v603, 1
    %v605 = vadd.f32 %v603, %v604
    %v606 = vsel %vm126, %v585, 0.0
    %v607 = vrot.slane %v606, 4
    %v608 = vadd.f32 %v606, %v607
    %v609 = vrot.slane %v608, 2
    %v610 = vadd.f32 %v608, %v609
    %v611 = vrot.slane %v610, 1
    %v612 = vadd.f32 %v610, %v611
    %v613 = vsel %vm126, %v586, 0.0
    %v614 = vrot.slane %v613, 4
    %v615 = vadd.f32 %v613, %v614
    %v616 = vrot.slane %v615, 2
    %v617 = vadd.f32 %v615, %v616
    %v618 = vrot.slane %v617, 1
    %v619 = vadd.f32 %v617, %v618
    %v620 = vsel %vm126, %v587, 0.0
    %v621 = vrot.slane %v620, 4
    %v622 = vadd.f32 %v620, %v621
    %v623 = vrot.slane %v622, 2
    %v624 = vadd.f32 %v622, %v623
    %v625 = vrot.slane %v624, 1
    %v626 = vadd.f32 %v624, %v625
    %v627 = vsel %vm126, %v588, 0.0
    %v628 = vrot.slane %v627, 4
    %v629 = vadd.f32 %v627, %v628
    %v630 = vrot.slane %v629, 2
    %v631 = vadd.f32 %v629, %v630
    %v632 = vrot.slane %v631, 1
    %v633 = vadd.f32 %v631, %v632
    %v634 = vsel %vm126, %v589, 0.0
    %v635 = vrot.slane %v634, 4
    %v636 = vadd.f32 %v634, %v635
    %v637 = vrot.slane %v636, 2
    %v638 = vadd.f32 %v636, %v637
    %v639 = vrot.slane %v638, 1
    %v640 = vadd.f32 %v638, %v639
    %v641 = vsel %vm126, %v590, 0.0
    %v642 = vrot.slane %v641, 4
    %v643 = vadd.f32 %v641, %v642
    %v644 = vrot.slane %v643, 2
    %v645 = vadd.f32 %v643, %v644
    %v646 = vrot.slane %v645, 1
    %v647 = vadd.f32 %v645, %v646
    %v648 = vsel %vm126, %v591, 0.0
    %v649 = vrot.slane %v648, 4
    %v650 = vadd.f32 %v648, %v649
    %v651 = vrot.slane %v650, 2
    %v652 = vadd.f32 %v650, %v651
    %v653 = vrot.slane %v652, 1
    %v654 = vadd.f32 %v652, %v653
    %v663 = vsel %vm392, %v612, %v605
    %v664 = vsel %vm394, %v619, %v663
    %v665 = vsel %vm396, %v626, %v664
    %v666 = vsel %vm398, %v633, %v665
    %v667 = vsel %vm400, %v640, %v666
    %v668 = vsel %vm402, %v647, %v667
    %v669 = vsel %vm404, %v654, %v668
    %v671 = vadd.f32 %v598, %v669
    %672 = vst.msk [vmem:[#allocation4] sm:$0xff] %vm126, %v671
    %673 = vst.msk [vmem:[#allocation2] sm:$0xff] %vm469, %v407
  $region41: #{_run_kernel.1} parent=0 // pred_fallthru
    _
  // Predicated region
  $region42: #{_run_kernel.1} parent=0 // pred_check
    %p674 = pneg %p32
  $region43: #{_run_kernel.1} parent=0 // pred_check_branch
    %676 = sbr.rel (%p674) target = $region45
  $region44: #{_run_kernel.1} parent=0 // pred_region
    %v677 = vld [vmem:[#allocation3] sm:$0xff]
    %vm678 = vcmp.gt.f32.partialorder %v677, 0.0
    %v679 = vsel %vm678, %v677, 1.0
    %v680 = vrcp.pop %v679
    %v681 = vmul.f32 %v679, %v680
    %v682 = vsub.f32 2.0, %v681
    %v683 = vmul.f32 %v680, %v682
    %v684 = vld [vmem:[#allocation4] sm:$0xff]
    %686 = vset.pattern.permute.xlu0 0
    %687 = vperm.xlu0 %686, %v683
    %v688 = vpop.permute.xlu0 %687
    %v690 = vmul.f32 %v684, %v688
    %v691 = vsel %vm678, 1, 0
    %692 = vset.pattern.permute.xlu0 0
    %693 = vperm.xlu0 %692, %v691
    %v694 = vpop.permute.xlu0 %693
    %vm695 = vcmp.eq.s32.totalorder %v694, 1
    %v696 = vsel %vm695, %v690, 0.0
    %v697 = vld [vmem:[%s7] sm:$0xff]
    %v698 = vld [vmem:[%s7 + $0x8] sm:$0xff]
    %v699 = vld [vmem:[%s7 + $0x10] sm:$0xff]
    %v700 = vld [vmem:[%s7 + $0x18] sm:$0xff]
    %v701 = vld [vmem:[%s8] sm:$0x1]
    %v703 = vperm.slane %v701, 0
    %vm705 = vcmask 261120
    %v707 = vsel %vm705, %v696, 0
    %709 = vmatpush.msra.mxu0 0.0
    %710 = vmatpush.msra.mxu0 0.0
    %711 = vmatpush.msra.mxu0 0.0
    %712 = vmatpush.msra.mxu0 0.0
    %713 = vmatpush.msra.mxu0 0.0
    %714 = vmatpush.msra.mxu0 0.0
    %715 = vmatpush.msra.mxu0 0.0
    %716 = vmatpush.msra.mxu0 0.0
    %717 = vmatpush.msra.mxu0 0.0
    %718 = vmatpush.msra.mxu0 0.0
    %719 = vmatpush.msra.mxu0 0.0
    %720 = vmatpush.msra.mxu0 0.0
    %721 = vmatpush.msra.mxu0 %v700
    %722 = vmatpush.msra.mxu0 %v699
    %723 = vmatpush.msra.mxu0 %v698
    %724 = vmatpush.msra.mxu0 %v697
    %725 = vmatmul.f32.gmra.mxu0 %v707
    %v726 = vpop.f32.mrf.mxu0
    %v727 = vadd.f32 %v703, %v726
    %728 = vdwg.mxu0
    %729 = vst [vmem:[%s9] sm:$0xff] %v727
  $region45: #{_run_kernel.1} parent=0 // pred_fallthru
    _
  // Predicated region
  $region46: #{_run_kernel.1} parent=0 // pred_check
    _
  $region47: #{_run_kernel.1} parent=0 // pred_check_branch
    %731 = sbr.rel (0) target = $region49
  $region48: #{_run_kernel.1} parent=0 // pred_region
    _
  $region49: #{_run_kernel.1} parent=0 // pred_fallthru
    _
  // Predicated region
  $region50: #{_run_kernel.1} parent=0 // pred_check
    _
  $region51: #{_run_kernel.1} parent=0 // pred_check_branch
    %733 = sbr.rel (0) target = $region53
  $region52: #{_run_kernel.1} parent=0 // pred_region
    _
  $region53: #{_run_kernel.1} parent=0 // pred_fallthru
    _

</llo_original>
